<compile_context>
chip_gen: v7x
topology: tpu7x:2x2x1
jax: 0.10.0
libtpu: 0.0.40
codegen_flags: <defaults>
</compile_context>

<pallas_src>
import math

import jax
import jax.numpy as jnp
from jax import lax
from jax.experimental import pallas as pl
from jax.experimental.pallas import tpu as pltpu


# ~25% headroom under v7x's 64 MiB per-TC VMEM; also lifts the 16/32 MiB
# default scoped limits on v5e/v6e so larger tiles are accepted.
_VMEM_LIMIT = 48 * 1024 * 1024


# ----------------------------------------------------------------------------
# Kernel 1: row-tiled dense linear layer   o = x @ W^T (+ b)
# Grid over row blocks; W^T (and bias) stay resident, x/out stream block-wise
# (double-buffered by the Pallas pipeline).
# ----------------------------------------------------------------------------
def _matmul_kernel(x_ref, wt_ref, o_ref):
    o_ref[...] = jnp.dot(x_ref[...], wt_ref[...],
                         preferred_element_type=jnp.float32)


def _matmul_bias_kernel(x_ref, wt_ref, b_ref, o_ref):
    o_ref[...] = (jnp.dot(x_ref[...], wt_ref[...],
                          preferred_element_type=jnp.float32)
                  + b_ref[...])


def linear(x, w_t, b=None, *, max_block_rows=512):
    m, k = x.shape
    n_out = w_t.shape[1]
    # Block of rows: full array if small, else 512 (multiple of 8).
    tm = m if m <= max_block_rows else max_block_rows
    grid = (pl.cdiv(m, tm),)
    x_spec = pl.BlockSpec((tm, k), lambda i: (i, 0))
    w_spec = pl.BlockSpec((k, n_out), lambda i: (0, 0))
    o_spec = pl.BlockSpec((tm, n_out), lambda i: (i, 0))
    cp = pltpu.CompilerParams(dimension_semantics=("parallel",),
                              vmem_limit_bytes=_VMEM_LIMIT)
    out_shape = jax.ShapeDtypeStruct((m, n_out), jnp.float32)
    if b is None:
        return pl.pallas_call(
            _matmul_kernel, out_shape=out_shape, grid=grid,
            in_specs=[x_spec, w_spec], out_specs=o_spec,
            compiler_params=cp)(x, w_t)
    b_spec = pl.BlockSpec((1, n_out), lambda i: (0, 0))
    return pl.pallas_call(
        _matmul_bias_kernel, out_shape=out_shape, grid=grid,
        in_specs=[x_spec, w_spec, b_spec], out_specs=o_spec,
        compiler_params=cp)(x, w_t, b.reshape(1, n_out))


# ----------------------------------------------------------------------------
# Kernel 2: attention, gridded over (head, q_block).
#   cont      = q_h @ k_h^T                          (MXU, bf16 -> f32 acc)
#   pos_attn  = einsum('ik,ijk->ij', q_h, pos_h)     (batched MXU matmul)
#   logits    = cont + pos_attn + bias_slab          (1/sqrt(C) folded in Wq,
#                                                     param*conv precomputed)
#   p         = softmax(logits, axis=-1)             (recip on EUP)
#   out_h     = p @ v_h                              (MXU, bf16 -> f32 acc)
# ----------------------------------------------------------------------------
def _attn_kernel(q_ref, k_ref, v_ref, pos_ref, bias_ref, p_ref, o_ref):
    q = q_ref[0]        # (tq, D)     bf16, already scaled by 1/sqrt(C) via Wq
    k = k_ref[0]        # (N,  D)     bf16
    v = v_ref[0]        # (N,  D)     bf16
    pos = pos_ref[0]    # (tq, N, D)  bf16

    # content attention: q @ k^T -> (tq, N), f32 accumulation on the MXU
    cont = lax.dot_general(q, k, (((1,), (1,)), ((), ())),
                           preferred_element_type=jnp.float32)

    # relative positional attention einsum('ik,ijk->ij') as a batched matmul
    # (batch = query row, M=1, K=D, N=keys): MXU instead of a VPU broadcast
    # multiply over an (N, N, D) intermediate.
    pos_attn = jnp.einsum('bqd,bkd->bqk', q[:, None, :], pos,
                          preferred_element_type=jnp.float32)[:, 0, :]

    logits = cont + pos_attn + bias_ref[...]

    # softmax over keys; divide moved to the (otherwise idle) EUP slot.
    mx = jnp.max(logits, axis=-1, keepdims=True)
    e = jnp.exp(logits - mx)
    p = e * pl.reciprocal(jnp.sum(e, axis=-1, keepdims=True), approx=True)

    p_ref[0] = p
    o_ref[0] = jnp.dot(p.astype(v.dtype), v, preferred_element_type=jnp.float32)


def attention(q, k, v, pos, bias_slab, *, max_q_rows=256):
    h, n, d = q.shape
    tq = n if n <= max_q_rows else max_q_rows   # multiple of 8 when < n
    grid = (h, pl.cdiv(n, tq))
    return pl.pallas_call(
        _attn_kernel,
        out_shape=(jax.ShapeDtypeStruct((h, n, n), jnp.float32),
                   jax.ShapeDtypeStruct((h, n, d), jnp.float32)),
        grid=grid,
        in_specs=[
            pl.BlockSpec((1, tq, d), lambda i, j: (i, j, 0)),      # q block
            pl.BlockSpec((1, n, d), lambda i, j: (i, 0, 0)),       # k (full head)
            pl.BlockSpec((1, n, d), lambda i, j: (i, 0, 0)),       # v (full head)
            pl.BlockSpec((1, tq, n, d), lambda i, j: (i, j, 0, 0)),  # pos block
            pl.BlockSpec((tq, n), lambda i, j: (j, 0)),            # param*conv
        ],
        out_specs=(
            pl.BlockSpec((1, tq, n), lambda i, j: (i, j, 0)),      # softmax probs
            pl.BlockSpec((1, tq, d), lambda i, j: (i, j, 0)),      # head outputs
        ),
        compiler_params=pltpu.CompilerParams(
            dimension_semantics=("parallel", "parallel"),   # heads shard on v7x TCs
            vmem_limit_bytes=_VMEM_LIMIT),
    )(q, k, v, pos, bias_slab)


# ----------------------------------------------------------------------------
# PositionalEmbedding buffer (deterministic sin/cos transform), flat (N*N, C).
# ----------------------------------------------------------------------------
def positional_embedding(positions, d):
    inv_freq = 1.0 / (10000.0 ** (jnp.arange(0.0, d, 2.0) / d))        # (d/2,)
    sinusoid = positions.astype(jnp.float32)[..., None] * inv_freq     # (N, N, d/2)
    return jnp.concatenate([jnp.sin(sinusoid), jnp.cos(sinusoid)], axis=-1)


# ----------------------------------------------------------------------------
# Full forward pass.
# ----------------------------------------------------------------------------
def multi_head_graph_attention(x, seq_mat, adj_dense, params):
    """x: (N, C) node features; seq_mat: (N, N) int positions;
    adj_dense: (N, N, 3) dense adjacency with 3 edge attrs (sign[2] + weight)."""
    n, c = x.shape
    h = params["n_heads"]
    d = c // h
    inv_sqrt_c = 1.0 / math.sqrt(c)

    # Fused q/k/v projection: one MXU pass over x; 1/sqrt(C) folded into Wq
    # (covers both cont_attn and pos_attn, which are linear in q).
    wqkv_t = jnp.concatenate(
        [params["wq_t"] * inv_sqrt_c, params["wk_t"], params["wv_t"]], axis=1)
    qkv = linear(x, wqkv_t)                                   # (N, 3C) f32
    # torch split_heads: raw (N, C) -> (H, N, D) view (no transpose).
    q = qkv[:, :c].reshape(h, n, d).astype(jnp.bfloat16)
    k = qkv[:, c:2 * c].reshape(h, n, d).astype(jnp.bfloat16)
    v = qkv[:, 2 * c:].reshape(h, n, d).astype(jnp.bfloat16)

    # positional path: sinusoid -> pos_lin (row-tiled Pallas matmul) -> raw view
    pos_emb = positional_embedding(seq_mat, c).reshape(n * n, c)   # (N*N, C)
    pos = linear(pos_emb, params["wp_t"], params["bp"])            # (N*N, C) f32
    pos = pos.astype(jnp.bfloat16).reshape(h, n, n, d)             # torch .view

    # 1x1 Conv2d(3->1) on the raw (3, N, N) view of the dense edge attrs,
    # hoisted out of the per-head loop (head-independent) and pre-scaled by
    # `param`; tiny pointwise op done once in JAX before the pallas_call.
    adj3 = adj_dense.reshape(3, n, n)      # same as torch .view(1, 3, N, -1)
    conv = (params["conv_w"][0] * adj3[0] + params["conv_w"][1] * adj3[1]
            + params["conv_w"][2] * adj3[2] + params["conv_b"])
    bias_slab = (params["param"] * conv).astype(jnp.float32)       # (N, N)

    probs, heads_out = attention(q, k, v, pos, bias_slab)

    # (H, N, D) -> (N, C) raw reshape, identical to torch .reshape(x.size(0), C)
    attn_out = heads_out.reshape(n, c)
    out = linear(attn_out, params["wo_t"])
    # TODO(synk): F.dropout(p=0.1, training=self.training) omitted (stochastic);
    # eval-mode identity is implemented.

    # torch attn_logits broadcasts to (1, H, N, N) via the conv add; the module
    # returns the post-softmax probabilities.
    return out, probs[None]


def init_params(key, in_channels, n_heads):
    c = in_channels
    ks = jax.random.split(key, 6)
    bound = 1.0 / math.sqrt(c)

    def lin_w(k):  # torch Linear weight (out, in); store transposed (in, out)
        return jax.random.uniform(k, (c, c), jnp.float32, -bound, bound).T

    return {
        "n_heads": n_heads,
        "wq_t": lin_w(ks[0]),
        "wk_t": lin_w(ks[1]),
        "wv_t": lin_w(ks[2]),
        "wo_t": lin_w(ks[3]),
        "wp_t": lin_w(ks[4]),
        "bp": jax.random.uniform(ks[5], (c,), jnp.float32, -bound, bound),
        # Conv2d(3, 1, 1): weight ~ U[0,1), bias = 0 (as in the module __init__)
        "conv_w": jax.random.uniform(jax.random.PRNGKey(123), (3,), jnp.float32),
        "conv_b": jnp.float32(0.0),
        # nn.Parameter(5.0).clamp_min(1.0)
        "param": jnp.maximum(jnp.float32(5.0), jnp.float32(1.0)),
    }


if __name__ == "__main__":
    N, C, H = 16, 32, 4   # nodes, in_channels, heads  (depth = 8)

    key = jax.random.PRNGKey(0)
    k_x, k_adj, k_mask, k_p = jax.random.split(key, 4)

    x = jax.random.normal(k_x, (N, C), jnp.float32)

    # seq_mat: relative position matrix (LongTensor in torch)
    seq_mat = (jnp.arange(N)[None, :] - jnp.arange(N)[:, None]).astype(jnp.int32)

    # dense adjacency with 3 edge attrs (stand-in for to_dense_adj(edge_index,
    # edge_attr=cat(sign, weight))): sparse random values, zeros where no edge.
    edge_mask = (jax.random.uniform(k_mask, (N, N, 1)) > 0.5).astype(jnp.float32)
    adj_dense = jax.random.uniform(k_adj, (N, N, 3), jnp.float32) * edge_mask

    params = init_params(k_p, C, H)

    out, attn_logits = multi_head_graph_attention(x, seq_mat, adj_dense, params)
    jax.block_until_ready((out, attn_logits))

    assert out.shape == (N, C)
    assert attn_logits.shape == (1, H, N, N)
    print("KERNEL_OK")
</pallas_src>

<mosaic_0001>
module attributes {stable_mosaic.version = 11 : i64} {
  func.func @_matmul_kernel(%arg0: i32, %arg1: memref<16x32xf32, #tpu.memory_space<vmem>>, %arg2: memref<32x96xf32, #tpu.memory_space<vmem>>, %arg3: memref<16x96xf32, #tpu.memory_space<vmem>>) attributes {dimension_semantics = [#tpu.dimension_semantics<parallel>], iteration_bounds = array<i64: 1>, scalar_prefetch = 0 : i64, scratch_operands = 0 : i64, tpu.core_type = #tpu.core_type<tc>, window_params = [{transform_indices = @transform_0, window_bounds = array<i64: 16, 32>}, {pipeline_mode = #tpu.pipeline_mode<synchronous>, transform_indices = @transform_1, window_bounds = array<i64: 32, 96>}, {transform_indices = @transform_2, window_bounds = array<i64: 16, 96>}]} {
    %c0 = arith.constant 0 : index
    %c0_0 = arith.constant 0 : index
    %0 = vector.load %arg1[%c0, %c0_0] : memref<16x32xf32, #tpu.memory_space<vmem>>, vector<16x32xf32>
    %c0_1 = arith.constant 0 : index
    %c0_2 = arith.constant 0 : index
    %1 = vector.load %arg2[%c0_1, %c0_2] : memref<32x96xf32, #tpu.memory_space<vmem>>, vector<32x96xf32>
    %cst = arith.constant dense<0.000000e+00> : vector<16x96xf32>
    %2 = tpu.matmul %0, %1, %cst {dimension_numbers = #tpu.dot_dimension_numbers<[1], [0], [0], [1], [0, 0, 1, 1], [], []>} : vector<16x32xf32>, vector<32x96xf32>, vector<16x96xf32> -> vector<16x96xf32>
    %c0_3 = arith.constant 0 : index
    %c0_4 = arith.constant 0 : index
    %3 = vector.load %arg3[%c0_3, %c0_4] : memref<16x96xf32, #tpu.memory_space<vmem>>, vector<16x96xf32>
    tpu.vector_store %arg3[%c0_3, %c0_4], %2 {strides = array<i32>} : memref<16x96xf32, #tpu.memory_space<vmem>>, vector<16x96xf32>,
    return
  }
  func.func @transform_0(%arg0: i32) -> (i32, i32) {
    %c0_i32 = arith.constant 0 : i32
    %c0_i32_0 = arith.constant 0 : i32
    return %arg0, %c0_i32 : i32, i32
  }
  func.func @transform_1(%arg0: i32) -> (i32, i32) {
    %c0_i32 = arith.constant 0 : i32
    %c0_i32_0 = arith.constant 0 : i32
    %c0_i32_1 = arith.constant 0 : i32
    return %c0_i32, %c0_i32_0 : i32, i32
  }
  func.func @transform_2(%arg0: i32) -> (i32, i32) {
    %c0_i32 = arith.constant 0 : i32
    %c0_i32_0 = arith.constant 0 : i32
    return %arg0, %c0_i32 : i32, i32
  }
}

</mosaic_0001>

<llo_original>
// kernel: tpu_custom_call.1
$region0: #{tpu_custom_call.1}
  #allocation0 [shape = 'u32[]', space=smem, size = 0x4, offset = 0x4, fixed_abs, tag = 'smem constant byte address 0x4 - core index']
  #allocation1 [shape = 'u32[144,128]{1,0:T(1,128)}', space=vmem, size = 0x12000, scoped, tag = 'internal scratch']
  %s0 = inlined_call_operand.hbm [shape: f32[16,32], index: 0, kind: input, shape index: {}]
  %s1 = inlined_call_operand.hbm [shape: f32[32,96], index: 1, kind: input, shape index: {}]
  %s2 = inlined_call_operand.hbm [shape: f32[16,96], index: 2, kind: output, shape index: {}]
  %s3 = sld [smem:[#allocation0]]
  $region26: #{tpu_custom_call.1} parent=0
    _
  %s5 = ssub.s32 1, %s3
  %s6 = scalar_select 0, %s5, %s3
  $region1: #{tpu_custom_call.1} parent=0
    #allocation2 [shape = 'u8[8192]{0}', space=vmem, size = 0x2000, scoped, tag = 'input window, operand 0, single buffered']
    #allocation3 [shape = 's32[1]{0}', space=sflag, size = 0x4, scoped, tag = 'scoped memory for tpu_custom_call.1']
    #allocation4 [shape = 's32[1]{0}', space=sflag, size = 0x4, scoped, tag = 'scoped memory for tpu_custom_call.1']
    #allocation5 [shape = 'u8[16384]{0}', space=vmem, size = 0x4000, scoped, tag = 'input window, operand 1, single buffered']
    #allocation6 [shape = 's32[1]{0}', space=sflag, size = 0x4, scoped, tag = 'scoped memory for tpu_custom_call.1']
    #allocation7 [shape = 'u8[8192]{0}', space=vmem, size = 0x2000, scoped, tag = 'output window, operand 0, single buffered']
    %7 = vsyncpa [#allocation3], 0
    %8 = vsyncpa [#allocation6], 0
    %9 = vsyncpa [#allocation4], 0
    // Predicated region
    $region2: #{tpu_custom_call.1} parent=1 // pred_check
      _
    $region3: #{tpu_custom_call.1} parent=1 // pred_check_branch
      %11 = sbr.rel (0) target = $region5
    $region4: #{tpu_custom_call.1} parent=1 // pred_region
      %s13 = ssub.s32 256, 256
      %14 = vsyncadd [#allocation3], %s13
      %s15 = sshll.u32 [#allocation2], 4
      %s16 = int_to_ptr.vmem [resolvable:$true] %s15
      %21 = dma.hbm_to_vmem [thread:$0]  %s0, 256, %s16, [#allocation3], 128, 128, 8
    $region5: #{tpu_custom_call.1} parent=1 // pred_fallthru
      _
    // Predicated region
    $region6: #{tpu_custom_call.1} parent=1 // pred_check
      _
    $region7: #{tpu_custom_call.1} parent=1 // pred_check_branch
      %23 = sbr.rel (0) target = $region9
    $region8: #{tpu_custom_call.1} parent=1 // pred_region
      %s25 = ssub.s32 512, 512
      %26 = vsyncadd [#allocation6], %s25
      %s27 = sshll.u32 [#allocation5], 4
      %s28 = int_to_ptr.vmem [resolvable:$true] %s27
      %33 = dma.hbm_to_vmem [thread:$0]  %s1, 512, %s28, [#allocation6], 128, 128, 8
    $region9: #{tpu_custom_call.1} parent=1 // pred_fallthru
      _
    // Predicated region
    $region10: #{tpu_custom_call.1} parent=1 // pred_check
      _
    $region11: #{tpu_custom_call.1} parent=1 // pred_check_branch
      %35 = sbr.rel (0) target = $region13
    $region12: #{tpu_custom_call.1} parent=1 // pred_region
      %36 = dma.done [#allocation3], 256
    $region13: #{tpu_custom_call.1} parent=1 // pred_fallthru
      _
    // Predicated region
    $region14: #{tpu_custom_call.1} parent=1 // pred_check
      _
    $region15: #{tpu_custom_call.1} parent=1 // pred_check_branch
      %38 = sbr.rel (0) target = $region17
    $region16: #{tpu_custom_call.1} parent=1 // pred_region
      %39 = dma.done [#allocation6], 512
    $region17: #{tpu_custom_call.1} parent=1 // pred_fallthru
      _
    %v40 = vld [vmem:[#allocation2] sm:$0xff]
    %v41 = vld [vmem:[#allocation2 + $0x8] sm:$0xff]
    %v42 = vld [vmem:[#allocation5] sm:$0xff]
    %v43 = vld [vmem:[#allocation5 + $0x8] sm:$0xff]
    %v44 = vld [vmem:[#allocation5 + $0x10] sm:$0xff]
    %v45 = vld [vmem:[#allocation5 + $0x18] sm:$0xff]
    %vm46 = vcmask 261120
    %v48 = vsel %vm46, %v40, 0
    %v51 = vsel %vm46, %v41, 0
    %53 = vmatprep.subr.mxu0 0.0
    %54 = vmatpush1.msra.mxu0 %v42
    %55 = vmatprep.subr.mxu0 0.0
    %56 = vmatpush1.msra.mxu0 %v43
    %57 = vmatprep.subr.mxu0 0.0
    %58 = vmatpush1.msra.mxu0 %v44
    %59 = vmatprep.subr.mxu0 0.0
    %60 = vmatpush1.msra.mxu0 %v45
    %61 = vmatprep.subr.mxu0 0.0
    %62 = vmatpush1.msra.mxu0 0.0
    %63 = vmatprep.subr.mxu0 0.0
    %64 = vmatpush1.msra.mxu0 0.0
    %65 = vmatprep.subr.mxu0 0.0
    %66 = vmatpush1.msra.mxu0 0.0
    %67 = vmatprep.subr.mxu0 0.0
    %68 = vmatpush1.msra.mxu0 0.0
    %69 = vmatprep.subr.mxu0 0.0
    %70 = vmatpush1.msra.mxu0 0.0
    %71 = vmatprep.subr.mxu0 0.0
    %72 = vmatpush1.msra.mxu0 0.0
    %73 = vmatprep.subr.mxu0 0.0
    %74 = vmatpush1.msra.mxu0 0.0
    %75 = vmatprep.subr.mxu0 0.0
    %76 = vmatpush1.msra.mxu0 0.0
    %77 = vmatprep.subr.mxu0 0.0
    %78 = vmatpush1.msra.mxu0 0.0
    %79 = vmatprep.subr.mxu0 0.0
    %80 = vmatpush1.msra.mxu0 0.0
    %81 = vmatprep.subr.mxu0 0.0
    %82 = vmatpush1.msra.mxu0 0.0
    %83 = vmatprep.subr.mxu0 0.0
    %84 = vmatpush1.msra.mxu0 0.0
    %85 = vmatprep.subr.mxu0 0.0
    %86 = vmatpush1.msra.mxu0 0.0
    %87 = vmatprep.subr.mxu0 0.0
    %88 = vmatpush1.msra.mxu0 0.0
    %89 = vmatprep.subr.mxu0 0.0
    %90 = vmatpush1.msra.mxu0 0.0
    %91 = vmatprep.subr.mxu0 0.0
    %92 = vmatpush1.msra.mxu0 0.0
    %93 = vmatprep.subr.mxu0 0.0
    %94 = vmatpush1.msra.mxu0 0.0
    %95 = vmatprep.subr.mxu0 0.0
    %96 = vmatpush1.msra.mxu0 0.0
    %97 = vmatprep.subr.mxu0 0.0
    %98 = vmatpush1.msra.mxu0 0.0
    %99 = vmatprep.subr.mxu0 0.0
    %100 = vmatpush1.msra.mxu0 0.0
    %101 = vmatprep.subr.mxu0 0.0
    %102 = vmatpush1.msra.mxu0 0.0
    %103 = vmatprep.subr.mxu0 0.0
    %104 = vmatpush1.msra.mxu0 0.0
    %105 = vmatprep.subr.mxu0 0.0
    %106 = vmatpush1.msra.mxu0 0.0
    %107 = vmatprep.subr.mxu0 0.0
    %108 = vmatpush1.msra.mxu0 0.0
    %109 = vmatprep.subr.mxu0 0.0
    %110 = vmatpush1.msra.mxu0 0.0
    %111 = vmatprep.subr.mxu0 0.0
    %112 = vmatpush1.msra.mxu0 0.0
    %113 = vmatprep.subr.mxu0 0.0
    %114 = vmatpush1.msra.mxu0 0.0
    %115 = vmatprep.subr.mxu0 0.0
    %116 = vmatpush1.msra.mxu0 0.0
    %117 = vmatprep.mubr.f32.mxu0 0.0
    %118 = vmatmul.mubr.f32.gmra.mrb[0].mxu0 %v48
    %v119 = vpop.f32.mrb[0].mxu0
    %v120 = vadd.f32 0.0, %v119
    %v121 = vpop.f32.mrb[0].mxu0
    %122 = vmatprep.mubr.f32.mxu0 0.0
    %123 = vmatmul.mubr.f32.gmra.mrb[0].mxu0 %v51
    %v124 = vpop.f32.mrb[0].mxu0
    %v125 = vadd.f32 0.0, %v124
    %v126 = vpop.f32.mrb[0].mxu0
    %127 = vdwg.mxu0
    %vm128 = vcmask 785408
    %129 = vst.msk [vmem:[#allocation7] sm:$0xff] %vm128, %v120
    %130 = vst.msk [vmem:[#allocation7 + $0x8] sm:$0xff] %vm128, %v125
    // Predicated region
    $region18: #{tpu_custom_call.1} parent=1 // pred_check
      _
    $region19: #{tpu_custom_call.1} parent=1 // pred_check_branch
      %132 = sbr.rel (0) target = $region21
    $region20: #{tpu_custom_call.1} parent=1 // pred_region
      %s134 = ssub.s32 256, 256
      %135 = vsyncadd [#allocation4], %s134
      %s136 = sshll.u32 [#allocation7], 4
      %s137 = int_to_ptr.vmem [resolvable:$true] %s136
      %142 = dma.vmem_to_hbm [thread:$0]  %s137, 256, %s2, [#allocation4], 128, 128, 8
    $region21: #{tpu_custom_call.1} parent=1 // pred_fallthru
      _
    // Predicated region
    $region22: #{tpu_custom_call.1} parent=1 // pred_check
      _
    $region23: #{tpu_custom_call.1} parent=1 // pred_check_branch
      %144 = sbr.rel (0) target = $region25
    $region24: #{tpu_custom_call.1} parent=1 // pred_region
      %145 = dma.done [#allocation4], 256
    $region25: #{tpu_custom_call.1} parent=1 // pred_fallthru
      _
    %146 = vsyncpa [#allocation3], 1
    %147 = vsyncpa [#allocation6], 1
    %148 = vsyncpa [#allocation4], 1

</llo_original>
